<compile_context>
chip_gen: v7x
topology: tpu7x:2x2x1
jax: 0.10.0
libtpu: 0.0.40
codegen_flags: <defaults>
</compile_context>

<pallas_src>
import functools
import math

import jax
import jax.numpy as jnp
from jax.experimental import pallas as pl
from jax.experimental.pallas import tpu as pltpu


def _bin_centers(num_bins: int, angle_offset: float):
    interval = 2.0 * math.pi / num_bins
    centers = []
    for i in range(num_bins):
        c = i * interval + angle_offset
        if c > math.pi:
            c -= 2.0 * math.pi
        centers.append(c)
    return centers, interval


def _pick_tile_m(M: int) -> int:
    # Largest lane-dense tile that evenly divides M; fall back to full M for
    # small / ragged inputs (a full-extent block always satisfies the (8,128)
    # divisibility rule).  Max tile keeps the double-buffered footprint well
    # under the v7x 64 MiB / scoped-default VMEM budgets.
    for t in (2048, 1024, 512, 256, 128):
        if M % t == 0:
            return t
    return M


def _multibin_kernel(trig_ref, preds_ref, tgt_ref, out_ref, *, min_cos):
    # trig_ref : (num_bins, 2)            [:, 0] = cos(bin_center), [:, 1] = sin(bin_center)
    # preds_ref: (1, 4, num_bins, TM)     component-major, lane-dense
    # tgt_ref  : (1, 1, TM)
    # out_ref  : (1, 1, TM)
    l0 = preds_ref[0, 0]                       # (num_bins, TM)  class-0 logit
    l1 = preds_ref[0, 1]                       # (num_bins, TM)  class-1 logit
    cp = preds_ref[0, 2]                       # (num_bins, TM)  cos pred
    sp = preds_ref[0, 3]                       # (num_bins, TM)  sin pred
    t = tgt_ref[0]                             # (1, TM)         local angle

    cos_bc = trig_ref[:, 0:1]                  # (num_bins, 1)
    sin_bc = trig_ref[:, 1:2]                  # (num_bins, 1)

    # Angle-addition identity: only 2 transcendentals per location instead of
    # 2 * num_bins.  cos(t - bc) = cos t cos bc + sin t sin bc, etc.
    cos_t = jnp.cos(t)                         # (1, TM)
    sin_t = jnp.sin(t)
    cos_delta = cos_t * cos_bc + sin_t * sin_bc      # (num_bins, TM)
    sin_delta = sin_t * cos_bc - cos_t * sin_bc      # (num_bins, TM)

    # generate_cls_targets
    cls_t = cos_delta >= min_cos                     # bool (num_bins, TM)

    # 2-class cross entropy (reduce=False) as a stable softplus:
    #   target=1 -> softplus(l0 - l1), target=0 -> softplus(l1 - l0)
    z = jnp.where(cls_t, l0 - l1, l1 - l0)
    ce = jnp.maximum(z, 0.0) + jnp.log(1.0 + jnp.exp(-jnp.abs(z)))
    cls_loss = jnp.sum(ce, axis=0, keepdims=True)    # (1, TM)

    # Regression: -w * cos(t - bc - atan2(sp, cp)), expanded via
    #   cos(d - theta) = cos d * cos theta + sin d * sin theta,
    #   cos theta = cp / r, sin theta = sp / r.  atan2(0, 0) = 0 is honored.
    w = cls_t.astype(jnp.float32)
    r2 = cp * cp + sp * sp
    safe = r2 > 0.0
    inv_r = jax.lax.rsqrt(jnp.where(safe, r2, 1.0))
    cos_th = jnp.where(safe, cp * inv_r, 1.0)
    sin_th = jnp.where(safe, sp * inv_r, 0.0)
    cos_term = cos_delta * cos_th + sin_delta * sin_th

    reg_sum = jnp.sum(-w * cos_term, axis=0, keepdims=True)   # (1, TM)
    num_cov = jnp.sum(w, axis=0, keepdims=True)               # (1, TM)
    # Division matches torch semantics (inf/nan if no bin covers the angle).
    reg_loss = reg_sum / num_cov

    out_ref[0] = cls_loss + reg_loss


def multibin_loss(preds, targets, *, num_bins=4,
                  overlaps=math.pi / 6.0, angle_offset=0.0):
    N, M, C = preds.shape
    assert C == num_bins * 4, "preds last dim must be num_bins * 4"
    assert targets.shape == (N, M, 1)

    centers, interval = _bin_centers(num_bins, angle_offset)
    min_cos = math.cos((interval + overlaps) / 2.0)

    # Per-bin trig constants passed as a tiny input (stays resident in VMEM).
    bin_trig = jnp.asarray([[math.cos(c), math.sin(c)] for c in centers],
                           dtype=jnp.float32)                       # (num_bins, 2)

    # Single XLA transpose to a component-major, location-last layout:
    #   (N, M, num_bins, 4) -> (N, 4, num_bins, M)
    p = preds.astype(jnp.float32).reshape(N, M, num_bins, 4).transpose(0, 3, 2, 1)
    t = targets.astype(jnp.float32).reshape(N, 1, M)   # pure reshape, no copy

    tm = _pick_tile_m(M)
    grid = (N, M // tm)

    kernel = functools.partial(_multibin_kernel, min_cos=min_cos)

    out = pl.pallas_call(
        kernel,
        out_shape=jax.ShapeDtypeStruct((N, 1, M), jnp.float32),
        grid=grid,
        in_specs=[
            pl.BlockSpec((num_bins, 2), lambda i, j: (0, 0)),
            pl.BlockSpec((1, 4, num_bins, tm), lambda i, j: (i, 0, 0, j)),
            pl.BlockSpec((1, 1, tm), lambda i, j: (i, 0, j)),
        ],
        out_specs=pl.BlockSpec((1, 1, tm), lambda i, j: (i, 0, j)),
        compiler_params=pltpu.CompilerParams(
            dimension_semantics=("parallel", "parallel")),
    )(bin_trig, p, t)

    return out.reshape(N, M, 1)


def multibin_loss_ref(preds, targets, *, num_bins=4,
                      overlaps=math.pi / 6.0, angle_offset=0.0):
    """Pure-JAX reference mirroring the PyTorch forward (uses arctan2)."""
    N, M, _ = preds.shape
    centers, interval = _bin_centers(num_bins, angle_offset)
    bc = jnp.asarray(centers, jnp.float32).reshape(1, 1, -1)
    max_deltas = (interval + overlaps) / 2.0

    p = preds.reshape(N, M, num_bins, 4)
    cls_t = jnp.cos(targets - bc) >= math.cos(max_deltas)

    logits = p[..., :2]
    lse = jax.nn.logsumexp(logits, axis=-1)
    chosen = jnp.where(cls_t, logits[..., 1], logits[..., 0])
    cls_loss = jnp.sum(lse - chosen, axis=-1, keepdims=True)

    theta = jnp.arctan2(p[..., 3], p[..., 2])
    w = cls_t.astype(jnp.float32)
    reg = -w * jnp.cos(targets - bc - theta)
    num_covered = jnp.sum(w, axis=-1, keepdims=True)
    reg_loss = jnp.sum(reg, axis=-1, keepdims=True) / num_covered
    return cls_loss + reg_loss


if __name__ == "__main__":
    num_bins = 4
    key = jax.random.PRNGKey(0)

    # Small shape consistent with the module: preds (N, M, num_bins*4), targets (N, M, 1).
    N, M = 2, 16
    k_preds, k_tgt, k2p, k2t = jax.random.split(key, 4)
    preds = jax.random.normal(k_preds, (N, M, num_bins * 4), dtype=jnp.float32)
    targets = jax.random.uniform(k_tgt, (N, M, 1), dtype=jnp.float32,
                                 minval=-math.pi, maxval=math.pi)

    out = jax.block_until_ready(multibin_loss(preds, targets, num_bins=num_bins))
    ref = multibin_loss_ref(preds, targets, num_bins=num_bins)
    assert out.shape == (N, M, 1)
    assert jnp.allclose(out, ref, rtol=1e-5, atol=1e-5), \
        float(jnp.max(jnp.abs(out - ref)))

    # Also exercise the lane-dense multi-tile path (M divisible by 128).
    N2, M2 = 2, 384
    preds2 = jax.random.normal(k2p, (N2, M2, num_bins * 4), dtype=jnp.float32)
    targets2 = jax.random.uniform(k2t, (N2, M2, 1), dtype=jnp.float32,
                                  minval=-math.pi, maxval=math.pi)
    out2 = jax.block_until_ready(multibin_loss(preds2, targets2, num_bins=num_bins))
    ref2 = multibin_loss_ref(preds2, targets2, num_bins=num_bins)
    assert jnp.allclose(out2, ref2, rtol=1e-5, atol=1e-5), \
        float(jnp.max(jnp.abs(out2 - ref2)))

    print("KERNEL_OK")
</pallas_src>

<mosaic_0001>
module attributes {stable_mosaic.version = 11 : i64} {
  func.func @_multibin_kernel(%arg0: i32, %arg1: i32, %arg2: memref<4x2xf32, #tpu.memory_space<vmem>>, %arg3: memref<1x4x4x16xf32, #tpu.memory_space<vmem>>, %arg4: memref<1x1x16xf32, #tpu.memory_space<vmem>>, %arg5: memref<1x1x16xf32, #tpu.memory_space<vmem>>) attributes {dimension_semantics = [#tpu.dimension_semantics<parallel>, #tpu.dimension_semantics<parallel>], iteration_bounds = array<i64: 2, 1>, scalar_prefetch = 0 : i64, scratch_operands = 0 : i64, tpu.core_type = #tpu.core_type<tc>, window_params = [{pipeline_mode = #tpu.pipeline_mode<synchronous>, transform_indices = @transform_0, window_bounds = array<i64: 4, 2>}, {transform_indices = @transform_1, window_bounds = array<i64: 1, 4, 4, 16>}, {transform_indices = @transform_2, window_bounds = array<i64: 1, 1, 16>}, {transform_indices = @transform_3, window_bounds = array<i64: 1, 1, 16>}]} {
    %c0 = arith.constant 0 : index
    %c0_0 = arith.constant 0 : index
    %c0_1 = arith.constant 0 : index
    %c0_2 = arith.constant 0 : index
    %0 = vector.load %arg3[%c0, %c0_0, %c0_1, %c0_2] : memref<1x4x4x16xf32, #tpu.memory_space<vmem>>, vector<1x1x4x16xf32>
    %1 = vector.shape_cast %0 : vector<1x1x4x16xf32> to vector<4x16xf32>
    %c0_3 = arith.constant 0 : index
    %c1 = arith.constant 1 : index
    %c0_4 = arith.constant 0 : index
    %c0_5 = arith.constant 0 : index
    %2 = vector.load %arg3[%c0_3, %c1, %c0_4, %c0_5] : memref<1x4x4x16xf32, #tpu.memory_space<vmem>>, vector<1x1x4x16xf32>
    %3 = vector.shape_cast %2 : vector<1x1x4x16xf32> to vector<4x16xf32>
    %c0_6 = arith.constant 0 : index
    %c2 = arith.constant 2 : index
    %c0_7 = arith.constant 0 : index
    %c0_8 = arith.constant 0 : index
    %4 = vector.load %arg3[%c0_6, %c2, %c0_7, %c0_8] : memref<1x4x4x16xf32, #tpu.memory_space<vmem>>, vector<1x1x4x16xf32>
    %5 = vector.shape_cast %4 : vector<1x1x4x16xf32> to vector<4x16xf32>
    %c0_9 = arith.constant 0 : index
    %c3 = arith.constant 3 : index
    %c0_10 = arith.constant 0 : index
    %c0_11 = arith.constant 0 : index
    %6 = vector.load %arg3[%c0_9, %c3, %c0_10, %c0_11] : memref<1x4x4x16xf32, #tpu.memory_space<vmem>>, vector<1x1x4x16xf32>
    %7 = vector.shape_cast %6 : vector<1x1x4x16xf32> to vector<4x16xf32>
    %c0_12 = arith.constant 0 : index
    %c0_13 = arith.constant 0 : index
    %c0_14 = arith.constant 0 : index
    %8 = vector.load %arg4[%c0_12, %c0_13, %c0_14] : memref<1x1x16xf32, #tpu.memory_space<vmem>>, vector<1x1x16xf32>
    %9 = vector.shape_cast %8 : vector<1x1x16xf32> to vector<1x16xf32>
    %c0_15 = arith.constant 0 : index
    %c0_16 = arith.constant 0 : index
    %10 = vector.load %arg2[%c0_15, %c0_16] : memref<4x2xf32, #tpu.memory_space<vmem>>, vector<4x1xf32>
    %c0_17 = arith.constant 0 : index
    %c1_18 = arith.constant 1 : index
    %11 = vector.load %arg2[%c0_17, %c1_18] : memref<4x2xf32, #tpu.memory_space<vmem>>, vector<4x1xf32>
    %12 = math.cos %9 : vector<1x16xf32>
    %13 = math.sin %9 : vector<1x16xf32>
    %14 = vector.broadcast %12 : vector<1x16xf32> to vector<4x16xf32>
    %15 = vector.broadcast %10 : vector<4x1xf32> to vector<4x16xf32>
    %16 = arith.mulf %14, %15 : vector<4x16xf32>
    %17 = vector.broadcast %13 : vector<1x16xf32> to vector<4x16xf32>
    %18 = vector.broadcast %11 : vector<4x1xf32> to vector<4x16xf32>
    %19 = arith.mulf %17, %18 : vector<4x16xf32>
    %20 = arith.addf %16, %19 : vector<4x16xf32>
    %21 = vector.broadcast %13 : vector<1x16xf32> to vector<4x16xf32>
    %22 = vector.broadcast %10 : vector<4x1xf32> to vector<4x16xf32>
    %23 = arith.mulf %21, %22 : vector<4x16xf32>
    %24 = vector.broadcast %12 : vector<1x16xf32> to vector<4x16xf32>
    %25 = vector.broadcast %11 : vector<4x1xf32> to vector<4x16xf32>
    %26 = arith.mulf %24, %25 : vector<4x16xf32>
    %27 = arith.subf %23, %26 : vector<4x16xf32>
    %cst = arith.constant 5.000000e-01 : f32
    %28 = vector.broadcast %cst : f32 to vector<4x16xf32>
    %29 = arith.cmpf oge, %20, %28 : vector<4x16xf32>
    %30 = arith.subf %1, %3 : vector<4x16xf32>
    %31 = arith.subf %3, %1 : vector<4x16xf32>
    %32 = arith.select %29, %30, %31 : vector<4x16xi1>, vector<4x16xf32>
    %cst_19 = arith.constant 0.000000e+00 : f32
    %33 = vector.broadcast %cst_19 : f32 to vector<4x16xf32>
    %34 = arith.maximumf %32, %33 : vector<4x16xf32>
    %35 = math.absf %32 : vector<4x16xf32>
    %cst_20 = arith.constant 0.000000e+00 : f32
    %36 = vector.broadcast %cst_20 : f32 to vector<4x16xf32>
    %37 = arith.subf %36, %35 : vector<4x16xf32>
    %38 = math.exp %37 : vector<4x16xf32>
    %cst_21 = arith.constant 1.000000e+00 : f32
    %39 = vector.broadcast %cst_21 : f32 to vector<4x16xf32>
    %40 = arith.addf %39, %38 : vector<4x16xf32>
    %41 = math.log %40 : vector<4x16xf32>
    %42 = arith.addf %34, %41 : vector<4x16xf32>
    %cst_22 = arith.constant dense<0.000000e+00> : vector<16xf32>
    %43 = vector.multi_reduction <add>, %42, %cst_22 [0] : vector<4x16xf32> to vector<16xf32>
    %44 = vector.shape_cast %43 : vector<16xf32> to vector<1x16xf32>
    %45 = arith.extui %29 : vector<4x16xi1> to vector<4x16xi32>
    %46 = arith.sitofp %45 : vector<4x16xi32> to vector<4x16xf32>
    %47 = arith.mulf %5, %5 : vector<4x16xf32>
    %48 = arith.mulf %7, %7 : vector<4x16xf32>
    %49 = arith.addf %47, %48 : vector<4x16xf32>
    %cst_23 = arith.constant 0.000000e+00 : f32
    %50 = vector.broadcast %cst_23 : f32 to vector<4x16xf32>
    %51 = arith.cmpf ogt, %49, %50 : vector<4x16xf32>
    %cst_24 = arith.constant 1.000000e+00 : f32
    %52 = vector.broadcast %cst_24 : f32 to vector<4x16xf32>
    %53 = arith.select %51, %49, %52 : vector<4x16xi1>, vector<4x16xf32>
    %54 = math.rsqrt %53 : vector<4x16xf32>
    %55 = arith.mulf %5, %54 : vector<4x16xf32>
    %cst_25 = arith.constant 1.000000e+00 : f32
    %56 = vector.broadcast %cst_25 : f32 to vector<4x16xf32>
    %57 = arith.select %51, %55, %56 : vector<4x16xi1>, vector<4x16xf32>
    %58 = arith.mulf %7, %54 : vector<4x16xf32>
    %cst_26 = arith.constant 0.000000e+00 : f32
    %59 = vector.broadcast %cst_26 : f32 to vector<4x16xf32>
    %60 = arith.select %51, %58, %59 : vector<4x16xi1>, vector<4x16xf32>
    %61 = arith.mulf %20, %57 : vector<4x16xf32>
    %62 = arith.mulf %27, %60 : vector<4x16xf32>
    %63 = arith.addf %61, %62 : vector<4x16xf32>
    %cst_27 = arith.constant 0.000000e+00 : f32
    %64 = vector.broadcast %cst_27 : f32 to vector<4x16xf32>
    %65 = arith.subf %64, %46 : vector<4x16xf32>
    %66 = arith.mulf %65, %63 : vector<4x16xf32>
    %cst_28 = arith.constant dense<0.000000e+00> : vector<16xf32>
    %67 = vector.multi_reduction <add>, %66, %cst_28 [0] : vector<4x16xf32> to vector<16xf32>
    %68 = vector.shape_cast %67 : vector<16xf32> to vector<1x16xf32>
    %cst_29 = arith.constant dense<0.000000e+00> : vector<16xf32>
    %69 = vector.multi_reduction <add>, %46, %cst_29 [0] : vector<4x16xf32> to vector<16xf32>
    %70 = vector.shape_cast %69 : vector<16xf32> to vector<1x16xf32>
    %71 = arith.divf %68, %70 : vector<1x16xf32>
    %72 = arith.addf %44, %71 : vector<1x16xf32>
    %c0_30 = arith.constant 0 : index
    %c0_31 = arith.constant 0 : index
    %c0_32 = arith.constant 0 : index
    %73 = vector.load %arg5[%c0_30, %c0_31, %c0_32] : memref<1x1x16xf32, #tpu.memory_space<vmem>>, vector<1x1x16xf32>
    %74 = vector.shape_cast %73 : vector<1x1x16xf32> to vector<1x16xf32>
    %75 = vector.shape_cast %72 : vector<1x16xf32> to vector<1x1x16xf32>
    tpu.vector_store %arg5[%c0_30, %c0_31, %c0_32], %75 {strides = array<i32>} : memref<1x1x16xf32, #tpu.memory_space<vmem>>, vector<1x1x16xf32>,
    return
  }
  func.func @transform_0(%arg0: i32, %arg1: i32) -> (i32, i32) {
    %c0_i32 = arith.constant 0 : i32
    %c0_i32_0 = arith.constant 0 : i32
    %c0_i32_1 = arith.constant 0 : i32
    return %c0_i32, %c0_i32_0 : i32, i32
  }
  func.func @transform_1(%arg0: i32, %arg1: i32) -> (i32, i32, i32, i32) {
    %c0_i32 = arith.constant 0 : i32
    %c0_i32_0 = arith.constant 0 : i32
    %c0_i32_1 = arith.constant 0 : i32
    return %arg0, %c0_i32, %c0_i32_0, %arg1 : i32, i32, i32, i32
  }
  func.func @transform_2(%arg0: i32, %arg1: i32) -> (i32, i32, i32) {
    %c0_i32 = arith.constant 0 : i32
    %c0_i32_0 = arith.constant 0 : i32
    return %arg0, %c0_i32, %arg1 : i32, i32, i32
  }
  func.func @transform_3(%arg0: i32, %arg1: i32) -> (i32, i32, i32) {
    %c0_i32 = arith.constant 0 : i32
    %c0_i32_0 = arith.constant 0 : i32
    return %arg0, %c0_i32, %arg1 : i32, i32, i32
  }
}

</mosaic_0001>

<llo_original>
// kernel: tpu_custom_call.1
$region0: #{tpu_custom_call.1}
  #allocation0 [shape = 'u32[]', space=smem, size = 0x4, offset = 0x4, fixed_abs, tag = 'smem constant byte address 0x4 - core index']
  #allocation1 [shape = 'u32[144,128]{1,0:T(1,128)}', space=vmem, size = 0x12000, scoped, tag = 'internal scratch']
  %s0 = inlined_call_operand.vmem [shape: f32[4,2], index: 0, kind: input, shape index: {}]
  %s1 = inlined_call_operand.hbm [shape: f32[2,4,4,16], index: 1, kind: input, shape index: {}]
  %s2 = inlined_call_operand.vmem [shape: f32[2,1,16], index: 2, kind: input, shape index: {}]
  %s3 = inlined_call_operand.hbm [shape: f32[2,1,16], index: 3, kind: output, shape index: {}]
  %s4 = sld [smem:[#allocation0]]
  $region49: #{tpu_custom_call.1} parent=0
    _
  %s6 = ssub.s32 1, %s4
  %s7 = scalar_select 0, %s6, %s4
  $region1: #{tpu_custom_call.1} parent=0
    #allocation2 [shape = 'u8[16384]{0}', space=vmem, size = 0x4000, scoped, tag = 'input window, operand 1']
    #allocation3 [shape = 's32[2]{0}', space=sflag, size = 0x8, scoped, tag = 'scoped memory for tpu_custom_call.1']
    #allocation4 [shape = 's32[2]{0}', space=sflag, size = 0x8, scoped, tag = 'scoped memory for tpu_custom_call.1']
    #allocation5 [shape = 'u8[1024]{0}', space=vmem, size = 0x400, scoped, tag = 'output window, operand 0']
    %8 = vsyncpa [#allocation3], 0
    %s9 = scalar_lea.sflag [#allocation3], 1
    %10 = vsyncpa %s9, 0
    %11 = vsyncpa [#allocation4], 0
    %s12 = scalar_lea.sflag [#allocation4], 1
    %13 = vsyncpa %s12, 0
    loop: start=0, step=1, limit=4
    $region2: #{tpu_custom_call.1} parent=1 // loop_pre_header
      _
    $region3: #{tpu_custom_call.1} parent=1 // loop_header
      %s15 = sphi 0, %s19
      %p16 = scmp.ge.s32.totalorder %s15, 4
      %s22 = sphi 0, %s34
      %s23 = sphi 0, %s30
      %s24 = sphi 0, %s22
      %s25 = sphi 0, %s23
      %s26 = sphi 0, %s24
      %s27 = sphi 0, %s25
      %s35 = sphi 0, %s35
      %s37 = sphi 0, %s35
      %s38 = sphi 0, %s37
      %s52 = sphi 0, %s38
      %s60 = sphi 0, %s62
      %s63 = sphi 0, %s60
      %s64 = sphi 0, %s63
      %s80 = sphi 0, %s64
      %s88 = sphi 0, %s90
      %s91 = sphi 0, %s88
      %s92 = sphi 0, %s91
      %s108 = sphi 0, %s92
      %s116 = sphi 0, %s118
      %s119 = sphi 0, %s116
      %s120 = sphi 0, %s119
      %s136 = sphi 0, %s120
    $region4: #{tpu_custom_call.1} parent=1 // loop_header_branch
      %18 = sbr.rel (%p16) target = $region8
    $region5: #{tpu_custom_call.1} parent=1 // loop_body
      %s20 = ssub.s32 %s15, 1
      %s21 = ssub.s32 %s15, 2
      %s28 = sadd.s32 1, %s23
      %p29 = scmp.ge.s32.totalorder %s28, 1
      %s30 = scalar_select %p29, 0, %s28
      %s31 = sadd.s32 1, %s22
      %s32 = scalar_select %p29, %s31, %s22
      %p33 = scmp.ge.s32.totalorder %s32, 2
      %s34 = scalar_select %p33, 0, %s32
      %s36 = sadd.s32 %s35, 1
      %p39 = scmp.eq.s32.totalorder %s15, 1
      %p40 = scmp.ne.s32.totalorder %s35, %s37
      %p41 = scmp.eq.s32.totalorder %s15, 0
      %p42 = por %p40, %p41
      %p43 = scmp.ne.s32.totalorder %s35, %s37
      %p44 = scmp.eq.s32.totalorder %s20, 1
      %p45 = por %p43, %p44
      %p46 = scmp.ne.s32.totalorder %s37, %s38
      %p47 = scmp.eq.s32.totalorder %s20, 0
      %p48 = por %p46, %p47
      %p49 = scmp.ne.s32.totalorder %s37, %s38
      %p50 = scmp.eq.s32.totalorder %s21, 1
      %p51 = por %p49, %p50
      %p53 = scmp.ne.s32.totalorder %s38, %s52
      %p54 = scmp.eq.s32.totalorder %s21, 0
      %p55 = por %p53, %p54
      %s56 = ssub.s32 %s22, %s34
      %s57 = ssub.s32 %s23, %s30
      %s58 = sor.u32 %s56, %s57
      %p59 = scmp.eq.s32.totalorder %s58, 0
      %s61 = sadd.s32 %s60, 1
      %s62 = scalar_select %p59, %s60, %s61
      %p65 = pneg %p59
      %p66 = scmp.eq.s32.totalorder %s15, 1
      %p67 = por %p65, %p66
      %p68 = scmp.ne.s32.totalorder %s60, %s63
      %p69 = scmp.eq.s32.totalorder %s15, 0
      %p70 = por %p68, %p69
      %p71 = scmp.ne.s32.totalorder %s60, %s63
      %p72 = scmp.eq.s32.totalorder %s20, 1
      %p73 = por %p71, %p72
      %p74 = scmp.ne.s32.totalorder %s63, %s64
      %p75 = scmp.eq.s32.totalorder %s20, 0
      %p76 = por %p74, %p75
      %p77 = scmp.ne.s32.totalorder %s63, %s64
      %p78 = scmp.eq.s32.totalorder %s21, 1
      %p79 = por %p77, %p78
      %p81 = scmp.ne.s32.totalorder %s64, %s80
      %p82 = scmp.eq.s32.totalorder %s21, 0
      %p83 = por %p81, %p82
      %s84 = ssub.s32 %s22, %s34
      %s85 = ssub.s32 %s23, %s30
      %s86 = sor.u32 %s84, %s85
      %p87 = scmp.eq.s32.totalorder %s86, 0
      %s89 = sadd.s32 %s88, 1
      %s90 = scalar_select %p87, %s88, %s89
      %p93 = pneg %p87
      %p94 = scmp.eq.s32.totalorder %s15, 1
      %p95 = por %p93, %p94
      %p96 = scmp.ne.s32.totalorder %s88, %s91
      %p97 = scmp.eq.s32.totalorder %s15, 0
      %p98 = por %p96, %p97
      %p99 = scmp.ne.s32.totalorder %s88, %s91
      %p100 = scmp.eq.s32.totalorder %s20, 1
      %p101 = por %p99, %p100
      %p102 = scmp.ne.s32.totalorder %s91, %s92
      %p103 = scmp.eq.s32.totalorder %s20, 0
      %p104 = por %p102, %p103
      %p105 = scmp.ne.s32.totalorder %s91, %s92
      %p106 = scmp.eq.s32.totalorder %s21, 1
      %p107 = por %p105, %p106
      %p109 = scmp.ne.s32.totalorder %s92, %s108
      %p110 = scmp.eq.s32.totalorder %s21, 0
      %p111 = por %p109, %p110
      %s112 = ssub.s32 %s22, %s34
      %s113 = ssub.s32 %s23, %s30
      %s114 = sor.u32 %s112, %s113
      %p115 = scmp.eq.s32.totalorder %s114, 0
      %s117 = sadd.s32 %s116, 1
      %s118 = scalar_select %p115, %s116, %s117
      %p121 = pneg %p115
      %p122 = scmp.eq.s32.totalorder %s15, 1
      %p123 = por %p121, %p122
      %p124 = scmp.ne.s32.totalorder %s116, %s119
      %p125 = scmp.eq.s32.totalorder %s15, 0
      %p126 = por %p124, %p125
      %p127 = scmp.ne.s32.totalorder %s116, %s119
      %p128 = scmp.eq.s32.totalorder %s20, 1
      %p129 = por %p127, %p128
      %p130 = scmp.ne.s32.totalorder %s119, %s120
      %p131 = scmp.eq.s32.totalorder %s20, 0
      %p132 = por %p130, %p131
      %p133 = scmp.ne.s32.totalorder %s119, %s120
      %p134 = scmp.eq.s32.totalorder %s21, 1
      %p135 = por %p133, %p134
      %p137 = scmp.ne.s32.totalorder %s120, %s136
      %p138 = scmp.eq.s32.totalorder %s21, 0
      %p139 = por %p137, %p138
      %p140 = scmp.le.s32.totalorder 1, %s15
      %p141 = scmp.lt.s32.totalorder %s15, 3
      %p142 = pnand %p140, %p141
      %p143 = pneg %p142
      // Predicated region
      $region9: #{tpu_custom_call.1} parent=5 // pred_check
        _
      $region10: #{tpu_custom_call.1} parent=5 // pred_check_branch
        %145 = sbr.rel (%p142) target = $region12
      $region11: #{tpu_custom_call.1} parent=5 // pred_region
        %s146 = ssub.s32 %s15, 1
        // Predicated region
        $region13: #{tpu_custom_call.1} parent=11 // pred_check
          %p147 = pneg %p48
        $region14: #{tpu_custom_call.1} parent=11 // pred_check_branch
          %149 = sbr.rel (%p147) target = $region16
        $region15: #{tpu_custom_call.1} parent=11 // pred_region
          _
        $region16: #{tpu_custom_call.1} parent=11 // pred_fallthru
          _
      $region12: #{tpu_custom_call.1} parent=5 // pred_fallthru
        _
      %p150 = scmp.lt.s32.totalorder %s15, 2
      // Predicated region
      $region17: #{tpu_custom_call.1} parent=5 // pred_check
        %p151 = pneg %p150
      $region18: #{tpu_custom_call.1} parent=5 // pred_check_branch
        %153 = sbr.rel (%p151) target = $region20
      $region19: #{tpu_custom_call.1} parent=5 // pred_region
        // Predicated region
        $region21: #{tpu_custom_call.1} parent=19 // pred_check
          %p154 = pneg %p70
        $region22: #{tpu_custom_call.1} parent=19 // pred_check_branch
          %156 = sbr.rel (%p154) target = $region24
        $region23: #{tpu_custom_call.1} parent=19 // pred_region
          %s157 = sand.u32 %s60, 1
          %s158 = scalar_lea.sflag [#allocation3], %s157
          %s159 = sand.u32 %s60, 1
          %s160 = smul.addr %s159, 16
          %s161 = scalar_lea.vmem [#allocation2], %s160
          %s163 = ssub.s32 256, 256
          %164 = vsyncadd %s158, %s163
          %s165 = smul.addr %s22, 4
          %s166 = sadd.s32 %s23, %s165
          %s167 = smul.addr %s166, 64
          %s168 = scalar_lea.hbm %s1, %s167
          %s169 = sshll.u32 %s161, 4
          %s170 = int_to_ptr.vmem [resolvable:$true] %s169
          %175 = dma.hbm_to_vmem [thread:$0]  %s168, 256, %s170, %s158, 64, 64, 4
        $region24: #{tpu_custom_call.1} parent=19 // pred_fallthru
          _
        // Predicated region
        $region25: #{tpu_custom_call.1} parent=19 // pred_check
          %p176 = pneg %p98
        $region26: #{tpu_custom_call.1} parent=19 // pred_check_branch
          %178 = sbr.rel (%p176) target = $region28
        $region27: #{tpu_custom_call.1} parent=19 // pred_region
          %p179 = scmp.lt.s32.totalorder %s22, 1
          %s180 = scalar_select %p179, %s22, 1
          %p181 = scmp.lt.s32.totalorder %s23, 0
          %s182 = scalar_select %p181, %s23, 0
          %s183 = sadd.s32 %s182, %s180
          %s184 = scalar_lea.vmem %s2, %s183
        $region28: #{tpu_custom_call.1} parent=19 // pred_fallthru
          _
      $region20: #{tpu_custom_call.1} parent=5 // pred_fallthru
        _
      %p185 = scmp.le.s32.totalorder 1, %s15
      %p186 = scmp.lt.s32.totalorder %s15, 3
      %p187 = pnand %p185, %p186
      %p188 = pneg %p187
      // Predicated region
      $region29: #{tpu_custom_call.1} parent=5 // pred_check
        _
      $region30: #{tpu_custom_call.1} parent=5 // pred_check_branch
        %190 = sbr.rel (%p187) target = $region32
      $region31: #{tpu_custom_call.1} parent=5 // pred_region
        %s191 = ssub.s32 %s15, 1
        %s192 = sand.u32 %s63, 1
        %s193 = scalar_lea.sflag [#allocation3], %s192
        %s194 = sand.u32 %s63, 1
        %s195 = smul.addr %s194, 16
        %s196 = scalar_lea.vmem [#allocation2], %s195
        // Predicated region
        $region33: #{tpu_custom_call.1} parent=31 // pred_check
          %p197 = pneg %p76
        $region34: #{tpu_custom_call.1} parent=31 // pred_check_branch
          %199 = sbr.rel (%p197) target = $region36
        $region35: #{tpu_custom_call.1} parent=31 // pred_region
          %200 = dma.done %s193, 256
        $region36: #{tpu_custom_call.1} parent=31 // pred_fallthru
          _
        %p201 = pneg %p48
        %p202 = pneg %p45
        %s203 = sand.u32 %s63, 1
        %s204 = scalar_lea.sflag [#allocation3], %s203
        %s205 = sand.u32 %s63, 1
        %s206 = smul.addr %s205, 16
        %s207 = scalar_lea.vmem [#allocation2], %s206
        %p208 = pneg %p76
        %p209 = pneg %p73
        %p210 = scmp.lt.s32.totalorder %s24, 1
        %s211 = scalar_select %p210, %s24, 1
        %p212 = scmp.lt.s32.totalorder %s25, 0
        %s213 = scalar_select %p212, %s25, 0
        %s214 = sadd.s32 %s213, %s211
        %s215 = scalar_lea.vmem %s2, %s214
        %p216 = pneg %p104
        %p217 = pneg %p101
        %p218 = pneg %p132
        %p219 = pneg %p129
        %s220 = sand.u32 %s119, 1
        %s221 = scalar_lea.sflag [#allocation4], %s220
        %s222 = sand.u32 %s119, 1
        %s223 = scalar_lea.vmem [#allocation5], %s222
        %p224 = scmp.lt.s32.totalorder %s24, 1
        %s225 = scalar_select %p224, %s24, 1
        %p226 = scmp.lt.s32.totalorder %s25, 0
        %s227 = scalar_select %p226, %s25, 0
        %s228 = sadd.s32 %s227, %s225
        %s229 = scalar_lea.vmem %s2, %s228
        %v230 = vld [vmem:[%s196] sm:$0xf]
        %s231 = scalar_lea.vmem %s196, 4 [#allocation2]
        %v232 = vld [vmem:[%s231] sm:$0xf]
        %s233 = scalar_lea.vmem %s196, 8 [#allocation2]
        %v234 = vld [vmem:[%s233] sm:$0xf]
        %s235 = scalar_lea.vmem %s196, 12 [#allocation2]
        %v236 = vld [vmem:[%s235] sm:$0xf]
        %v237 = vld [vmem:[%s229] sm:$0x1]
        %v238 = vld [vmem:[%s0] sm:$0xf]
        %v239 = vand.u32 2147483647, %v237
        %vm240 = vcmp.le.f32.partialorder %v239, 0.7853982
        %vm241 = vcmp.lt.s32.totalorder %v237, 0
        %v242 = vand.u32 %v237, 2139095040
        %v243 = vshrl.u32 %v242, 23
        %v244 = vsub.s32 %v243, 127
        %v245 = vand.u32 2147483647, %v237
        %v246 = vand.u32 %v245, 8388607
        %v247 = vor.u32 %v246, 8388608
        %v248 = vsub.s32 0, %v247
        %v249 = vadd.s32 %v244, 1
        %vm250 = vcmp.gt.s32.totalorder %v249, 0
        %v251 = vsel %vm250, %v249, 0
        %v252 = vshrl.u32 %v251, 5
        %v253 = vand.u32 %v251, 31
        %v254 = vsub.s32 32, %v253
        %v255 = vshrl.u32 683565275, %v254
        %v256 = vshll.u32 683565275, %v253
        %v257 = vshrl.u32 2475754826, %v254
        %v258 = vor.u32 %v256, %v257
        %v259 = vshll.u32 2475754826, %v253
        %v260 = vshrl.u32 2131351028, %v254
        %v261 = vor.u32 %v259, %v260
        %v262 = vshll.u32 2131351028, %v253
        %v263 = vshrl.u32 2102212464, %v254
        %v264 = vor.u32 %v262, %v263
        %v265 = vshll.u32 2102212464, %v253
        %v266 = vshrl.u32 920167782, %v254
        %v267 = vor.u32 %v265, %v266
        %v268 = vshll.u32 920167782, %v253
        %v269 = vshrl.u32 1326507024, %v254
        %v270 = vor.u32 %v268, %v269
        %vm271 = vcmp.lt.s32.totalorder %v252, 1
        %vm272 = vcmp.lt.s32.totalorder %v252, 2
        %vm273 = vcmp.lt.s32.totalorder %v252, 3
        %vm274 = vcmp.lt.s32.totalorder %v252, 4
        %v275 = vsel %vm271, %v255, %v258
        %v276 = vsel %vm274, %v264, 2102212464
        %v277 = vsel %vm273, %v261, %v276
        %v278 = vsel %vm272, %v275, %v277
        %v279 = vsel %vm271, %v258, %v261
        %v280 = vsel %vm274, %v267, 920167782
        %v281 = vsel %vm273, %v264, %v280
        %v282 = vsel %vm272, %v279, %v281
        %v283 = vsel %vm271, %v261, %v264
        %v284 = vsel %vm274, %v270, 1326507024
        %v285 = vsel %vm273, %v267, %v284
        %v286 = vsel %vm272, %v283, %v285
        %v287 = vshll.u32 %v247, 8
        %v288 = vmul.u32.u64.compose %v287, %v286
        %v289 = vextract.low.u32 %v288
        %v290 = vextract.high.u32 %v288
        %v291 = vmul.u32.u64.compose %v287, %v282
        %v292 = vextract.low.u32 %v291
        %v293 = vextract.high.u32 %v291
        %v294 = vmul.u32 %v287, %v278
        %v295 = vadd.s32 %v290, %v292
        %vm296 = vc.u32 %v290, %v292
        %v297 = vadd.s32 %v293, 1
        %v298 = vsel %vm296, %v297, %v293
        %v299 = vadd.s32 %v294, %v298
        %v300 = vadd.s32 %v299, 536870912
        %v301 = vshrl.u32 %v300, 30
        %v302 = vshll.u32 %v301, 30
        %v303 = vsub.s32 %v299, %v302
        %vm304 = vcmp.lt.s32.totalorder %v303, 0
        %v305 = vsub.s32 0, %v303
        %v306 = vsel %vm304, %v305, %v303
        %v307 = vclz %v306
        %v308 = vsub.s32 %v307, 2
        %vm309 = vcmp.gt.s32.totalorder 0, %v308
        %v310 = vsel %vm309, 0, %v308
        %v311 = vsub.s32 32, %v310
        %v312 = vshll.u32 %v303, %v310
        %v313 = vshrl.u32 %v295, %v311
        %v314 = vor.u32 %v312, %v313
        %v315 = vsub.s32 4294967266, %v310
        %v316 = vadd.s32 %v315, 127
        %v317 = vshll.u32 %v316, 23
        %v318 = vor.u32 4788187, %v317
        %v319 = vand.u32 2147483647, %v318
        %v321 = vcvt.s32.f32 %v314
        %v322 = vmul.f32 %v321, %v319
        %v323 = vxor.u32 %v322, 2147483648
        %v324 = vsel %vm241, %v323, %v322
        %v325 = vsub.s32 4, %v301
        %v326 = vsel %vm241, %v325, %v301
        %v327 = vsel %vm240, %v237, %v324
        %v328 = vsel %vm240, 0, %v326
        %v329 = vcosq.f32.pop %v327
        %v330 = vsinq.f32.pop %v327
        %vm331 = vweird.f32 %v237
        %v332 = vand.u32 %v328, 3
        %vm333 = vcmp.lt.s32.totalorder %v332, 2
        %vm334 = vcmp.eq.s32.totalorder %v332, 0
        %v335 = vxor.u32 %v330, 2147483648
        %v336 = vsel %vm334, %v329, %v335
        %vm337 = vcmp.eq.s32.totalorder %v332, 2
        %v338 = vxor.u32 %v329, 2147483648
        %v339 = vsel %vm337, %v338, %v330
        %v340 = vsel %vm333, %v336, %v339
        %v341 = vsel %vm331, nan, %v340
        %v342 = vand.u32 2147483647, %v237
        %vm343 = vcmp.le.f32.partialorder %v342, 0.7853982
        %vm344 = vcmp.lt.s32.totalorder %v237, 0
        %v345 = vand.u32 %v237, 2139095040
        %v346 = vshrl.u32 %v345, 23
        %v347 = vsub.s32 %v346, 127
        %v348 = vand.u32 2147483647, %v237
        %v349 = vand.u32 %v348, 8388607
        %v350 = vor.u32 %v349, 8388608
        %v351 = vsub.s32 0, %v350
        %v352 = vadd.s32 %v347, 1
        %vm353 = vcmp.gt.s32.totalorder %v352, 0
        %v354 = vsel %vm353, %v352, 0
        %v355 = vshrl.u32 %v354, 5
        %v356 = vand.u32 %v354, 31
        %v357 = vsub.s32 32, %v356
        %v358 = vshrl.u32 683565275, %v357
        %v359 = vshll.u32 683565275, %v356
        %v360 = vshrl.u32 2475754826, %v357
        %v361 = vor.u32 %v359, %v360
        %v362 = vshll.u32 2475754826, %v356
        %v363 = vshrl.u32 2131351028, %v357
        %v364 = vor.u32 %v362, %v363
        %v365 = vshll.u32 2131351028, %v356
        %v366 = vshrl.u32 2102212464, %v357
        %v367 = vor.u32 %v365, %v366
        %v368 = vshll.u32 2102212464, %v356
        %v369 = vshrl.u32 920167782, %v357
        %v370 = vor.u32 %v368, %v369
        %v371 = vshll.u32 920167782, %v356
        %v372 = vshrl.u32 1326507024, %v357
        %v373 = vor.u32 %v371, %v372
        %vm374 = vcmp.lt.s32.totalorder %v355, 1
        %vm375 = vcmp.lt.s32.totalorder %v355, 2
        %vm376 = vcmp.lt.s32.totalorder %v355, 3
        %vm377 = vcmp.lt.s32.totalorder %v355, 4
        %v378 = vsel %vm374, %v358, %v361
        %v379 = vsel %vm377, %v367, 2102212464
        %v380 = vsel %vm376, %v364, %v379
        %v381 = vsel %vm375, %v378, %v380
        %v382 = vsel %vm374, %v361, %v364
        %v383 = vsel %vm377, %v370, 920167782
        %v384 = vsel %vm376, %v367, %v383
        %v385 = vsel %vm375, %v382, %v384
        %v386 = vsel %vm374, %v364, %v367
        %v387 = vsel %vm377, %v373, 1326507024
        %v388 = vsel %vm376, %v370, %v387
        %v389 = vsel %vm375, %v386, %v388
        %v390 = vshll.u32 %v350, 8
        %v391 = vmul.u32.u64.compose %v390, %v389
        %v392 = vextract.low.u32 %v391
        %v393 = vextract.high.u32 %v391
        %v394 = vmul.u32.u64.compose %v390, %v385
        %v395 = vextract.low.u32 %v394
        %v396 = vextract.high.u32 %v394
        %v397 = vmul.u32 %v390, %v381
        %v398 = vadd.s32 %v393, %v395
        %vm399 = vc.u32 %v393, %v395
        %v400 = vadd.s32 %v396, 1
        %v401 = vsel %vm399, %v400, %v396
        %v402 = vadd.s32 %v397, %v401
        %v403 = vadd.s32 %v402, 536870912
        %v404 = vshrl.u32 %v403, 30
        %v405 = vshll.u32 %v404, 30
        %v406 = vsub.s32 %v402, %v405
        %vm407 = vcmp.lt.s32.totalorder %v406, 0
        %v408 = vsub.s32 0, %v406
        %v409 = vsel %vm407, %v408, %v406
        %v410 = vclz %v409
        %v411 = vsub.s32 %v410, 2
        %vm412 = vcmp.gt.s32.totalorder 0, %v411
        %v413 = vsel %vm412, 0, %v411
        %v414 = vsub.s32 32, %v413
        %v415 = vshll.u32 %v406, %v413
        %v416 = vshrl.u32 %v398, %v414
        %v417 = vor.u32 %v415, %v416
        %v418 = vsub.s32 4294967266, %v413
        %v419 = vadd.s32 %v418, 127
        %v420 = vshll.u32 %v419, 23
        %v421 = vor.u32 4788187, %v420
        %v422 = vand.u32 2147483647, %v421
        %v424 = vcvt.s32.f32 %v417
        %v425 = vmul.f32 %v424, %v422
        %v426 = vxor.u32 %v425, 2147483648
        %v427 = vsel %vm344, %v426, %v425
        %v428 = vsub.s32 4, %v404
        %v429 = vsel %vm344, %v428, %v404
        %v430 = vsel %vm343, %v237, %v427
        %v431 = vsel %vm343, 0, %v429
        %v432 = vcosq.f32.pop %v430
        %v433 = vsinq.f32.pop %v430
        %vm434 = vweird.f32 %v237
        %v435 = vadd.s32 %v431, 3
        %v436 = vand.u32 %v435, 3
        %vm437 = vcmp.lt.s32.totalorder %v436, 2
        %vm438 = vcmp.eq.s32.totalorder %v436, 0
        %v439 = vxor.u32 %v433, 2147483648
        %v440 = vsel %vm438, %v432, %v439
        %vm441 = vcmp.eq.s32.totalorder %v436, 2
        %v442 = vxor.u32 %v432, 2147483648
        %v443 = vsel %vm441, %v442, %v433
        %v444 = vsel %vm437, %v440, %v443
        %v445 = vsel %vm434, nan, %v444
        %v447 = vlaneseq
        %v448 = vshrl.u32 %v447, 7
        %v449 = vsub.s32 0, %v448
        %v450 = vrot.slane %v341, %v449
        %453 = vset.pattern.permute.xlu0 0
        %454 = vperm.xlu0 %453, %v238
        %v455 = vpop.permute.xlu0 %454
        %v457 = vmul.f32 %v450, %v455
        %v459 = vlaneseq
        %v460 = vshrl.u32 %v459, 7
        %v461 = vsub.s32 0, %v460
        %v462 = vrot.slane %v445, %v461
        %464 = vset.pattern.permute.xlu0 1
        %465 = vperm.xlu0 %464, %v238
        %v466 = vpop.permute.xlu0 %465
        %v468 = vmul.f32 %v462, %v466
        %v469 = vadd.f32 %v457, %v468
        %v470 = vmul.f32 %v462, %v455
        %v471 = vmul.f32 %v450, %v466
        %v472 = vsub.f32 %v470, %v471
        %vm473 = vcmp.ge.f32.partialorder %v469, 0.5
        %v474 = vsub.f32 %v230, %v232
        %v475 = vsub.f32 %v232, %v230
        %v476 = vsel %vm473, %v474, %v475
        %v477 = vmax.f32 %v476, 0.0
        %v478 = vand.u32 2147483647, %v476
        %v479 = vsub.f32 0.0, %v478
        %v480 = vmul.f32 %v479, 1.442695
        %v481 = vpow.pop %v480
        %v482 = vadd.f32 %v481, 1.0
        %v483 = vlog2.pop %v482
        %v484 = vmul.f32 %v483, 0.6931472
        %v485 = vadd.f32 %v477, %v484
        %vm486 = vcmask 125952
        %v487 = vsel %vm486, %v485, 0.0
        %v488 = vrot.slane %v487, 4
        %v489 = vadd.f32 %v487, %v488
        %v490 = vrot.slane %v489, 2
        %v491 = vadd.f32 %v489, %v490
        %v492 = vrot.slane %v491, 1
        %v493 = vadd.f32 %v491, %v492
        %v494 = vsel %vm473, 1, 0
        %v495 = vcvt.s32.f32 %v494
        %v496 = vmul.f32 %v234, %v234
        %v497 = vmul.f32 %v236, %v236
        %v498 = vadd.f32 %v496, %v497
        %vm499 = vcmp.gt.f32.partialorder %v498, 0.0
        %v500 = vsel %vm499, %v498, 1.0
        %v501 = vrsqrt.pop %v500
        %v502 = vmul.f32 %v234, %v501
        %v503 = vsel %vm499, %v502, 1.0
        %v504 = vmul.f32 %v236, %v501
        %v505 = vsel %vm499, %v504, 0.0
        %v506 = vmul.f32 %v469, %v503
        %v507 = vmul.f32 %v472, %v505
        %v508 = vadd.f32 %v506, %v507
        %v509 = vsub.f32 0.0, %v495
        %v510 = vmul.f32 %v509, %v508
        %v511 = vsel %vm486, %v510, 0.0
        %v512 = vrot.slane %v511, 4
        %v513 = vadd.f32 %v511, %v512
        %v514 = vrot.slane %v513, 2
        %v515 = vadd.f32 %v513, %v514
        %v516 = vrot.slane %v515, 1
        %v517 = vadd.f32 %v515, %v516
        %v518 = vsel %vm486, %v495, 0.0
        %v519 = vrot.slane %v518, 4
        %v520 = vadd.f32 %v518, %v519
        %v521 = vrot.slane %v520, 2
        %v522 = vadd.f32 %v520, %v521
        %v523 = vrot.slane %v522, 1
        %v524 = vadd.f32 %v522, %v523
        %v525 = vrcp.pop %v524
        %v526 = vmul.f32 %v517, %v525
        %v527 = vadd.f32 %v493, %v526
        %vm528 = vcmask 122880
        %529 = vst.msk [vmem:[%s223] sm:$0x1] %vm528, %v527
        %s530 = sand.u32 %s119, 1
        %s531 = scalar_lea.sflag [#allocation4], %s530
        %s532 = sand.u32 %s119, 1
        %s533 = scalar_lea.vmem [#allocation5], %s532
        // Predicated region
        $region37: #{tpu_custom_call.1} parent=31 // pred_check
          %p534 = pneg %p129
        $region38: #{tpu_custom_call.1} parent=31 // pred_check_branch
          %536 = sbr.rel (%p534) target = $region40
        $region39: #{tpu_custom_call.1} parent=31 // pred_region
          %s538 = ssub.s32 16, 16
          %539 = vsyncadd %s531, %s538
          %s540 = sadd.s32 %s25, %s24
          %s541 = smul.addr %s540, 16
          %s542 = scalar_lea.hbm %s3, %s541
          %s544 = sshll.u32 %s533, 4
          %s545 = int_to_ptr.vmem [resolvable:$true] %s544
          %547 = dma.vmem_to_hbm [thread:$0]  %s545, 16, %s542, %s531
        $region40: #{tpu_custom_call.1} parent=31 // pred_fallthru
          _
      $region32: #{tpu_custom_call.1} parent=5 // pred_fallthru
        _
      %p548 = scmp.le.s32.totalorder 2, %s15
      // Predicated region
      $region41: #{tpu_custom_call.1} parent=5 // pred_check
        %p549 = pneg %p548
      $region42: #{tpu_custom_call.1} parent=5 // pred_check_branch
        %551 = sbr.rel (%p549) target = $region44
      $region43: #{tpu_custom_call.1} parent=5 // pred_region
        %s552 = ssub.s32 %s15, 2
        // Predicated region
        $region45: #{tpu_custom_call.1} parent=43 // pred_check
          %p553 = pneg %p135
        $region46: #{tpu_custom_call.1} parent=43 // pred_check_branch
          %555 = sbr.rel (%p553) target = $region48
        $region47: #{tpu_custom_call.1} parent=43 // pred_region
          %s556 = sand.u32 %s120, 1
          %s557 = scalar_lea.sflag [#allocation4], %s556
          %s558 = sand.u32 %s120, 1
          %s559 = scalar_lea.vmem [#allocation5], %s558
          %560 = dma.done %s557, 16
        $region48: #{tpu_custom_call.1} parent=43 // pred_fallthru
          _
      $region44: #{tpu_custom_call.1} parent=5 // pred_fallthru
        _
    $region6: #{tpu_custom_call.1} parent=1 // loop_footer
      %s19 = sadd.s32 1, %s15
    $region7: #{tpu_custom_call.1} parent=1 // loop_footer_branch
      %14 = sbr.rel target = $region3
    $region8: #{tpu_custom_call.1} parent=1 // loop_exit
      _
    %561 = vsyncpa [#allocation3], 1
    %s562 = scalar_lea.sflag [#allocation3], 1
    %563 = vsyncpa %s562, 1
    %564 = vsyncpa [#allocation4], 1
    %s565 = scalar_lea.sflag [#allocation4], 1
    %566 = vsyncpa %s565, 1

</llo_original>
